<compile_context>
chip_gen: v7x
topology: tpu7x:2x2x1
jax: 0.10.0
libtpu: 0.0.40
codegen_flags: <defaults>
</compile_context>

<pallas_src>
import functools
import math

import jax
import jax.numpy as jnp
from jax.experimental import pallas as pl
from jax.experimental.pallas import tpu as pltpu

THD_NEG = -2.0
THD_POS = 1.0


def _round_up(v: int, m: int) -> int:
    return ((v + m - 1) // m) * m


def _vmem_capacity_bytes() -> int:
    try:
        return int(pltpu.get_tpu_info().vmem_capacity_bytes)
    except Exception:
        return 64 * 1024 * 1024  # conservative fallback (v7x per-TC VMEM)


def lsq_linear_kernel(x_ref, w_ref, b_ref, s_ref, out_ref, wnew_ref, part_ref, *, use_bf16):
    # Hoisted scalar math (scalar-unit only; per-element path stays pure VPU).
    s = s_ref[0, 0]
    inv_s = 1.0 / s
    lo_thr = THD_NEG * s
    hi_thr = THD_POS * s
    lo_clamp = (THD_NEG + 0.2) * s
    hi_clamp = (THD_POS - 0.2) * s

    # --- mirrors the in-place `self.weight.data = torch.where(...)` mutations ---
    w = w_ref[...].astype(jnp.float32)
    w = jnp.where(w <= lo_thr, lo_clamp, w)
    w = jnp.where(w >= hi_thr, hi_clamp, w)
    wnew_ref[...] = w.astype(wnew_ref.dtype)      # aliased in place with the weight input

    # --- LSQ quantization (forward path of round_pass is just round) ---
    # NOTE: the two clamping `where`s above guarantee (for s > 0) that w*inv_s lies
    # strictly inside (THD_NEG, THD_POS): lo_clamp = -1.8s, hi_clamp = 0.8s.  The
    # torch.clamp is therefore a no-op and intentionally omitted (saves 2 VPU ops per
    # weight element).  Do not reorder the clamp below the quantization.
    q_int = jnp.round(w * inv_s)                  # quant levels in {-2, -1, 0, 1}
    q_w = q_int * s

    # --- per-tile partial of ||w - q_w||_2^2; sqrt(sum over tiles) done in the wrapper,
    #     so the grid axis is stateless and can be sharded across TensorCores ---
    diff = w - q_w
    ps = jnp.sum(diff * diff)
    rid = jax.lax.broadcasted_iota(jnp.int32, part_ref.shape, 0)
    cid = jax.lax.broadcasted_iota(jnp.int32, part_ref.shape, 1)
    part_ref[...] = jnp.where((rid == 0) & (cid == 0), ps, jnp.float32(0.0))

    # --- F.linear(input, q_weight, bias): contract along K without materializing q_w.T ---
    if use_bf16:
        # bf16 MXU fast path: the quant levels are small integers (exact in bf16); only
        # the activation cast rounds.  Scale is factored out of the matmul.
        acc = jax.lax.dot_general(
            x_ref[...].astype(jnp.bfloat16), q_int.astype(jnp.bfloat16),
            dimension_numbers=(((1,), (1,)), ((), ())),
            preferred_element_type=jnp.float32,
        ) * s
    else:
        lhs = x_ref[...]
        if lhs.dtype != jnp.float32:
            lhs = lhs.astype(jnp.float32)
        acc = jax.lax.dot_general(
            lhs, q_w,
            dimension_numbers=(((1,), (1,)), ((), ())),
            preferred_element_type=jnp.float32,
        )
    out_ref[...] = (acc + b_ref[...]).astype(out_ref.dtype)


def quantized_linear_lsq(x, weight, bias, step_size, *, tile_n=None, use_bf16_matmul=False):
    """Returns (output, mutated_weight, quantization_loss).

    Assumes step_size > 0 (module default 1.8), so zero padding is inert for both
    the clamping and the loss.
    """
    B, K = x.shape
    N, K2 = weight.shape
    assert K == K2
    if bias is None:
        bias = jnp.zeros((N,), weight.dtype)

    out_dtype = x.dtype
    w_dtype = weight.dtype
    x_bytes = jnp.dtype(x.dtype).itemsize
    w_bytes = jnp.dtype(w_dtype).itemsize
    out_bytes = jnp.dtype(out_dtype).itemsize

    # Lane/sublane alignment: K padded to lane multiples, B to the f32 sublane.
    B_p = _round_up(B, 8)
    K_p = _round_up(K, 128)

    def footprint(tn):
        # Per-step VMEM: double-buffered I/O blocks + in-kernel f32 intermediates
        # (clamped w, q, diff live roughly simultaneously -> ~3 tile-sized f32 slabs).
        return (2 * B_p * K_p * x_bytes            # resident x (counted at 2 bufs, conservative)
                + 2 * tn * K_p * w_bytes           # weight tile in
                + 2 * tn * K_p * w_bytes           # mutated-weight tile out (aliased)
                + 2 * B_p * tn * out_bytes         # output tile
                + 2 * tn * 4 + 2 * 8 * 128 * 4     # bias + loss partial
                + 3 * tn * K_p * 4)                # in-kernel intermediates

    vmem_cap = _vmem_capacity_bytes()
    # Generation-aware block budget: ~40 MiB on v7x (64 MiB VMEM), ~64 MiB on v5e/v6e (128 MiB).
    budget = min(64 * 1024 * 1024, (vmem_cap * 5) // 8)

    if tile_n is None:
        tile_n = 2048
        while tile_n > 128 and footprint(tile_n) > budget:
            tile_n //= 2                           # stays a power-of-two multiple of 128
        tile_n = min(tile_n, _round_up(N, 128))    # don't over-pad small N
    tile_n = max(128, _round_up(int(tile_n), 128))
    # TODO(synk): also tile K (and add an M/batch grid axis) when a single (tile_n, K)
    # weight slab or the resident (B, K) activation no longer fits the VMEM budget.
    N_p = _round_up(N, tile_n)
    grid_n = N_p // tile_n

    vmem_limit = int(min(vmem_cap - 2 * 1024 * 1024,
                         max(footprint(tile_n) + 8 * 1024 * 1024, 32 * 1024 * 1024)))

    x_p = jnp.zeros((B_p, K_p), x.dtype).at[:B, :K].set(x)
    w_p = jnp.zeros((N_p, K_p), w_dtype).at[:N, :K].set(weight)
    b_p = jnp.zeros((1, N_p), jnp.float32).at[0, :N].set(bias.astype(jnp.float32))
    s = jnp.asarray(step_size, jnp.float32).reshape(1, 1)

    kernel = functools.partial(lsq_linear_kernel, use_bf16=use_bf16_matmul)

    out, w_new, partials = pl.pallas_call(
        kernel,
        grid=(grid_n,),
        in_specs=[
            pl.BlockSpec((B_p, K_p), lambda i: (0, 0)),      # x: resident across N tiles
            pl.BlockSpec((tile_n, K_p), lambda i: (i, 0)),   # weight tile
            pl.BlockSpec((1, tile_n), lambda i: (0, i)),     # bias tile
            pl.BlockSpec((1, 1), lambda i: (0, 0),
                         memory_space=pltpu.MemorySpace.SMEM),   # step_size scalar
        ],
        out_specs=(
            pl.BlockSpec((B_p, tile_n), lambda i: (0, i)),   # output tile
            pl.BlockSpec((tile_n, K_p), lambda i: (i, 0)),   # mutated-weight tile (aliased)
            pl.BlockSpec((8, 128), lambda i: (0, i)),        # per-tile loss partial
        ),
        out_shape=(
            jax.ShapeDtypeStruct((B_p, N_p), out_dtype),
            jax.ShapeDtypeStruct((N_p, K_p), w_dtype),
            jax.ShapeDtypeStruct((8, grid_n * 128), jnp.float32),
        ),
        # Weight is mutated in place (mirrors torch's `self.weight.data = ...`).
        input_output_aliases={1: 1},
        # The N axis now carries no cross-tile state (loss is per-tile partials), so it
        # can be sharded across TensorCores (v7x megacore).
        compiler_params=pltpu.CompilerParams(
            dimension_semantics=("parallel",),
            vmem_limit_bytes=vmem_limit,
        ),
    )(x_p, w_p, b_p, s)

    loss = jnp.sqrt(jnp.sum(partials))             # globalVal.loss = ||w - q_w||_2
    return out[:B, :N], w_new[:N, :K], loss


def reference(x, weight, bias, step_size):
    s = jnp.float32(step_size)
    w = jnp.where(weight <= THD_NEG * s, (THD_NEG + 0.2) * s, weight)
    w = jnp.where(w >= THD_POS * s, (THD_POS - 0.2) * s, w)
    q_w = jnp.round(jnp.clip(w / s, THD_NEG, THD_POS)) * s
    loss = jnp.sqrt(jnp.sum((w - q_w) ** 2))
    out = jax.lax.dot_general(x, q_w, (((1,), (1,)), ((), ())),
                              precision=jax.lax.Precision.HIGHEST) + bias[None, :]
    return out, w, loss


if __name__ == "__main__":
    in_features, out_features, batch = 256, 384, 8

    key = jax.random.PRNGKey(0)
    kx, kw, kb = jax.random.split(key, 3)

    # deterministic parameter init mirroring reset_parameters():
    # kaiming_uniform_(a=0): bound = sqrt(6 / fan_in); bias: U(-1/sqrt(fan_in), 1/sqrt(fan_in))
    fan_in = in_features
    w_bound = math.sqrt(6.0 / fan_in)
    weight = jax.random.uniform(kw, (out_features, in_features),
                                minval=-w_bound, maxval=w_bound, dtype=jnp.float32)
    b_bound = 1.0 / math.sqrt(fan_in)
    bias = jax.random.uniform(kb, (out_features,),
                              minval=-b_bound, maxval=b_bound, dtype=jnp.float32)
    x = jax.random.normal(kx, (batch, in_features), dtype=jnp.float32)

    # step_size=1.8 is the module default; 0.05 exercises non-trivial clamping and
    # multi-level quantization.  tile_n=128 forces a 3-step grid at these demo sizes.
    for step_size in (1.8, 0.05):
        ref_out, ref_w, ref_loss = reference(x, weight, bias, step_size)

        # exact (f32 MXU) path
        out, w_new, loss = quantized_linear_lsq(x, weight, bias, step_size, tile_n=128)
        jax.block_until_ready((out, w_new, loss))
        assert jnp.allclose(out, ref_out, atol=5e-3, rtol=5e-3), (
            step_size, float(jnp.max(jnp.abs(out - ref_out))))
        assert jnp.allclose(w_new, ref_w, atol=1e-6), step_size
        assert jnp.allclose(loss, ref_loss, atol=1e-3, rtol=1e-4), (
            step_size, float(loss), float(ref_loss))

        # bf16 MXU fast path (weight side exact, only the activation cast rounds)
        out_bf, _, loss_bf = quantized_linear_lsq(x, weight, bias, step_size,
                                                  tile_n=128, use_bf16_matmul=True)
        jax.block_until_ready((out_bf, loss_bf))
        assert jnp.allclose(out_bf, ref_out, atol=3e-2, rtol=3e-2), (
            step_size, float(jnp.max(jnp.abs(out_bf - ref_out))))
        assert jnp.allclose(loss_bf, ref_loss, atol=1e-3, rtol=1e-4), step_size

    print("KERNEL_OK")
</pallas_src>

<mosaic_0001>
module attributes {stable_mosaic.version = 11 : i64} {
  func.func @lsq_linear_kernel(%arg0: i32, %arg1: memref<8x256xf32, #tpu.memory_space<vmem>>, %arg2: memref<128x256xf32, #tpu.memory_space<vmem>>, %arg3: memref<1x128xf32, #tpu.memory_space<vmem>>, %arg4: memref<1x1xf32, #tpu.memory_space<smem>>, %arg5: memref<8x128xf32, #tpu.memory_space<vmem>>, %arg6: memref<128x256xf32, #tpu.memory_space<vmem>>, %arg7: memref<8x128xf32, #tpu.memory_space<vmem>>) attributes {dimension_semantics = [#tpu.dimension_semantics<parallel>], iteration_bounds = array<i64: 3>, scalar_prefetch = 0 : i64, scratch_operands = 0 : i64, tpu.core_type = #tpu.core_type<tc>, window_params = [{pipeline_mode = #tpu.pipeline_mode<synchronous>, transform_indices = @transform_0, window_bounds = array<i64: 8, 256>}, {transform_indices = @transform_1, window_bounds = array<i64: 128, 256>}, {transform_indices = @transform_2, window_bounds = array<i64: 1, 128>}, {transform_indices = @transform_3, window_bounds = array<i64: 1, 1>}, {transform_indices = @transform_4, window_bounds = array<i64: 8, 128>}, {transform_indices = @transform_5, window_bounds = array<i64: 128, 256>}, {transform_indices = @transform_6, window_bounds = array<i64: 8, 128>}]} {
    %c0 = arith.constant 0 : index
    %c0_0 = arith.constant 0 : index
    %0 = memref.load %arg4[%c0, %c0_0] : memref<1x1xf32, #tpu.memory_space<smem>>
    %cst = arith.constant 1.000000e+00 : f32
    %1 = arith.divf %cst, %0 : f32
    %cst_1 = arith.constant -2.000000e+00 : f32
    %2 = arith.mulf %cst_1, %0 : f32
    %cst_2 = arith.constant 1.000000e+00 : f32
    %3 = arith.mulf %cst_2, %0 : f32
    %cst_3 = arith.constant -1.800000e+00 : f32
    %4 = arith.mulf %cst_3, %0 : f32
    %cst_4 = arith.constant 8.000000e-01 : f32
    %5 = arith.mulf %cst_4, %0 : f32
    %c0_5 = arith.constant 0 : index
    %c0_6 = arith.constant 0 : index
    %6 = vector.load %arg2[%c0_5, %c0_6] : memref<128x256xf32, #tpu.memory_space<vmem>>, vector<128x256xf32>
    %7 = vector.broadcast %2 : f32 to vector<128x256xf32>
    %8 = arith.cmpf ole, %6, %7 : vector<128x256xf32>
    %9 = vector.broadcast %4 : f32 to vector<128x256xf32>
    %10 = arith.select %8, %9, %6 : vector<128x256xi1>, vector<128x256xf32>
    %11 = vector.broadcast %3 : f32 to vector<128x256xf32>
    %12 = arith.cmpf oge, %10, %11 : vector<128x256xf32>
    %13 = vector.broadcast %5 : f32 to vector<128x256xf32>
    %14 = arith.select %12, %13, %10 : vector<128x256xi1>, vector<128x256xf32>
    %c0_7 = arith.constant 0 : index
    %c0_8 = arith.constant 0 : index
    %15 = vector.load %arg6[%c0_7, %c0_8] : memref<128x256xf32, #tpu.memory_space<vmem>>, vector<128x256xf32>
    tpu.vector_store %arg6[%c0_7, %c0_8], %14 {strides = array<i32>} : memref<128x256xf32, #tpu.memory_space<vmem>>, vector<128x256xf32>,
    %16 = vector.broadcast %1 : f32 to vector<128x256xf32>
    %17 = arith.mulf %14, %16 : vector<128x256xf32>
    %18 = math.roundeven %17 : vector<128x256xf32>
    %19 = vector.broadcast %0 : f32 to vector<128x256xf32>
    %20 = arith.mulf %18, %19 : vector<128x256xf32>
    %21 = arith.subf %14, %20 : vector<128x256xf32>
    %22 = arith.mulf %21, %21 : vector<128x256xf32>
    %23 = vector.shape_cast %22 : vector<128x256xf32> to vector<1x128x256xf32>
    %cst_9 = arith.constant dense<0.000000e+00> : vector<1xf32>
    %24 = vector.multi_reduction <add>, %23, %cst_9 [1, 2] : vector<1x128x256xf32> to vector<1xf32>
    %25 = vector.shape_cast %24 : vector<1xf32> to vector<1x1x1xf32>
    %26 = vector.extract %25[0, 0, 0] : f32 from vector<1x1x1xf32>
    %27 = tpu.iota {dimensions = array<i32: 0>} : vector<8x128xi32>
    %28 = tpu.iota {dimensions = array<i32: 1>} : vector<8x128xi32>
    %c0_i32 = arith.constant 0 : i32
    %29 = vector.broadcast %c0_i32 : i32 to vector<8x128xi32>
    %30 = arith.cmpi eq, %27, %29 : vector<8x128xi32>
    %c0_i32_10 = arith.constant 0 : i32
    %31 = vector.broadcast %c0_i32_10 : i32 to vector<8x128xi32>
    %32 = arith.cmpi eq, %28, %31 : vector<8x128xi32>
    %33 = arith.andi %30, %32 : vector<8x128xi1>
    %cst_11 = arith.constant 0.000000e+00 : f32
    %34 = vector.broadcast %26 : f32 to vector<8x128xf32>
    %35 = vector.broadcast %cst_11 : f32 to vector<8x128xf32>
    %36 = arith.select %33, %34, %35 : vector<8x128xi1>, vector<8x128xf32>
    %c0_12 = arith.constant 0 : index
    %c0_13 = arith.constant 0 : index
    %37 = vector.load %arg7[%c0_12, %c0_13] : memref<8x128xf32, #tpu.memory_space<vmem>>, vector<8x128xf32>
    tpu.vector_store %arg7[%c0_12, %c0_13], %36 {strides = array<i32>} : memref<8x128xf32, #tpu.memory_space<vmem>>, vector<8x128xf32>,
    %c0_14 = arith.constant 0 : index
    %c0_15 = arith.constant 0 : index
    %38 = vector.load %arg1[%c0_14, %c0_15] : memref<8x256xf32, #tpu.memory_space<vmem>>, vector<8x256xf32>
    %cst_16 = arith.constant dense<0.000000e+00> : vector<8x128xf32>
    %39 = tpu.matmul %38, %20, %cst_16 {dimension_numbers = #tpu.dot_dimension_numbers<[1], [1], [0], [0], [0, 0, 1, 0], [], []>} : vector<8x256xf32>, vector<128x256xf32>, vector<8x128xf32> -> vector<8x128xf32>
    %c0_17 = arith.constant 0 : index
    %c0_18 = arith.constant 0 : index
    %40 = vector.load %arg3[%c0_17, %c0_18] : memref<1x128xf32, #tpu.memory_space<vmem>>, vector<1x128xf32>
    %41 = vector.broadcast %40 : vector<1x128xf32> to vector<8x128xf32>
    %42 = arith.addf %39, %41 : vector<8x128xf32>
    %c0_19 = arith.constant 0 : index
    %c0_20 = arith.constant 0 : index
    %43 = vector.load %arg5[%c0_19, %c0_20] : memref<8x128xf32, #tpu.memory_space<vmem>>, vector<8x128xf32>
    tpu.vector_store %arg5[%c0_19, %c0_20], %42 {strides = array<i32>} : memref<8x128xf32, #tpu.memory_space<vmem>>, vector<8x128xf32>,
    return
  }
  func.func @transform_0(%arg0: i32) -> (i32, i32) {
    %c0_i32 = arith.constant 0 : i32
    %c0_i32_0 = arith.constant 0 : i32
    %c0_i32_1 = arith.constant 0 : i32
    return %c0_i32, %c0_i32_0 : i32, i32
  }
  func.func @transform_1(%arg0: i32) -> (i32, i32) {
    %c0_i32 = arith.constant 0 : i32
    %c0_i32_0 = arith.constant 0 : i32
    return %arg0, %c0_i32 : i32, i32
  }
  func.func @transform_2(%arg0: i32) -> (i32, i32) {
    %c0_i32 = arith.constant 0 : i32
    %c0_i32_0 = arith.constant 0 : i32
    return %c0_i32, %arg0 : i32, i32
  }
  func.func @transform_3(%arg0: i32) -> (i32, i32) {
    %c0_i32 = arith.constant 0 : i32
    %c0_i32_0 = arith.constant 0 : i32
    %c0_i32_1 = arith.constant 0 : i32
    return %c0_i32, %c0_i32_0 : i32, i32
  }
  func.func @transform_4(%arg0: i32) -> (i32, i32) {
    %c0_i32 = arith.constant 0 : i32
    %c0_i32_0 = arith.constant 0 : i32
    return %c0_i32, %arg0 : i32, i32
  }
  func.func @transform_5(%arg0: i32) -> (i32, i32) {
    %c0_i32 = arith.constant 0 : i32
    %c0_i32_0 = arith.constant 0 : i32
    return %arg0, %c0_i32 : i32, i32
  }
  func.func @transform_6(%arg0: i32) -> (i32, i32) {
    %c0_i32 = arith.constant 0 : i32
    %c0_i32_0 = arith.constant 0 : i32
    return %c0_i32, %arg0 : i32, i32
  }
}

</mosaic_0001>

<llo_original>
// kernel: tpu_custom_call.1
$region0: #{tpu_custom_call.1}
  #allocation0 [shape = 'u32[]', space=smem, size = 0x4, offset = 0x4, fixed_abs, tag = 'smem constant byte address 0x4 - core index']
  #allocation1 [shape = 'u32[144,128]{1,0:T(1,128)}', space=vmem, size = 0x12000, scoped, tag = 'internal scratch']
  #allocation2 [shape = 'f32[1,1]{1,0:T(1,128)S(6)}', space=smem, size = 0x200, scoped, tag = 'scoped memory for tpu_custom_call.1']
  %s0 = inlined_call_operand.vmem [shape: f32[8,256], index: 0, kind: input, shape index: {}]
  %s1 = inlined_call_operand.hbm [shape: f32[384,256], index: 1, kind: input, shape index: {}, may-alias: {1,5}]
  %s2 = inlined_call_operand.vmem [shape: f32[1,384], index: 2, kind: input, shape index: {}]
  %s3 = inlined_call_operand.<no memory space> [shape: f32[1,1], index: 3, kind: input, shape index: {}]
  %s4 = inlined_call_operand.hbm [shape: f32[8,384], index: 4, kind: output, shape index: {0}]
  %s5 = inlined_call_operand.hbm [shape: f32[384,256], index: 5, kind: output, shape index: {1}, may-alias: {1,5}]
  %s6 = inlined_call_operand.hbm [shape: f32[8,384], index: 6, kind: output, shape index: {2}]
  %7 = xla_tuple %s4, %s5, %s6
  %s8 = sld [smem:[#allocation0]]
  $region69: #{tpu_custom_call.1} parent=0
    _
  %s10 = ssub.s32 1, %s8
  %s11 = scalar_select 0, %s10, %s8
  %12 = sst [smem:[#allocation2]] %s3
  $region1: #{tpu_custom_call.1} parent=0
    #allocation3 [shape = 'u8[262144]{0}', space=vmem, size = 0x40000, scoped, tag = 'input window, operand 1']
    #allocation4 [shape = 's32[2]{0}', space=sflag, size = 0x8, scoped, tag = 'scoped memory for tpu_custom_call.1']
    #allocation5 [shape = 's32[2]{0}', space=sflag, size = 0x8, scoped, tag = 'scoped memory for tpu_custom_call.1']
    #allocation6 [shape = 'u8[8192]{0}', space=vmem, size = 0x2000, scoped, tag = 'output window, operand 0']
    #allocation7 [shape = 'u8[262144]{0}', space=vmem, size = 0x40000, scoped, tag = 'output window, operand 1']
    #allocation8 [shape = 's32[2]{0}', space=sflag, size = 0x8, scoped, tag = 'scoped memory for tpu_custom_call.1']
    #allocation9 [shape = 'u8[8192]{0}', space=vmem, size = 0x2000, scoped, tag = 'output window, operand 2']
    %13 = vsyncpa [#allocation4], 0
    %s14 = scalar_lea.sflag [#allocation4], 1
    %15 = vsyncpa %s14, 0
    %16 = vsyncpa [#allocation5], 0
    %s17 = scalar_lea.sflag [#allocation5], 1
    %18 = vsyncpa %s17, 0
    %19 = vsyncpa [#allocation8], 0
    %s20 = scalar_lea.sflag [#allocation8], 1
    %21 = vsyncpa %s20, 0
    loop: start=0, step=1, limit=5
    $region2: #{tpu_custom_call.1} parent=1 // loop_pre_header
      _
    $region3: #{tpu_custom_call.1} parent=1 // loop_header
      %s23 = sphi 0, %s27
      %p24 = scmp.ge.s32.totalorder %s23, 5
      %s31 = sphi 0, %s31
      %s33 = sphi 0, %s31
      %s34 = sphi 0, %s33
      %s48 = sphi 0, %s34
      %s54 = sphi 0, %s56
      %s57 = sphi 0, %s54
      %s58 = sphi 0, %s57
      %s74 = sphi 0, %s58
      %s80 = sphi 0, %s82
      %s83 = sphi 0, %s80
      %s84 = sphi 0, %s83
      %s100 = sphi 0, %s84
      %s104 = sphi 0, %s104
      %s106 = sphi 0, %s104
      %s107 = sphi 0, %s106
      %s121 = sphi 0, %s107
      %s127 = sphi 0, %s129
      %s130 = sphi 0, %s127
      %s131 = sphi 0, %s130
      %s147 = sphi 0, %s131
      %s153 = sphi 0, %s155
      %s156 = sphi 0, %s153
      %s157 = sphi 0, %s156
      %s173 = sphi 0, %s157
      %s179 = sphi 0, %s181
      %s182 = sphi 0, %s179
      %s183 = sphi 0, %s182
      %s199 = sphi 0, %s183
    $region4: #{tpu_custom_call.1} parent=1 // loop_header_branch
      %26 = sbr.rel (%p24) target = $region8
    $region5: #{tpu_custom_call.1} parent=1 // loop_body
      %s28 = ssub.s32 %s23, 1
      %s29 = ssub.s32 %s23, 2
      %s30 = sadd.s32 %s23, 1
      %s32 = sadd.s32 %s31, 1
      %p35 = scmp.eq.s32.totalorder %s23, 2
      %p36 = scmp.ne.s32.totalorder %s31, %s33
      %p37 = scmp.eq.s32.totalorder %s23, 0
      %p38 = por %p36, %p37
      %p39 = scmp.ne.s32.totalorder %s31, %s33
      %p40 = scmp.eq.s32.totalorder %s28, 2
      %p41 = por %p39, %p40
      %p42 = scmp.ne.s32.totalorder %s33, %s34
      %p43 = scmp.eq.s32.totalorder %s28, 0
      %p44 = por %p42, %p43
      %p45 = scmp.ne.s32.totalorder %s33, %s34
      %p46 = scmp.eq.s32.totalorder %s29, 2
      %p47 = por %p45, %p46
      %p49 = scmp.ne.s32.totalorder %s34, %s48
      %p50 = scmp.eq.s32.totalorder %s29, 0
      %p51 = por %p49, %p50
      %s52 = ssub.s32 %s23, %s30
      %p53 = scmp.eq.s32.totalorder %s52, 0
      %s55 = sadd.s32 %s54, 1
      %s56 = scalar_select %p53, %s54, %s55
      %p59 = pneg %p53
      %p60 = scmp.eq.s32.totalorder %s23, 2
      %p61 = por %p59, %p60
      %p62 = scmp.ne.s32.totalorder %s54, %s57
      %p63 = scmp.eq.s32.totalorder %s23, 0
      %p64 = por %p62, %p63
      %p65 = scmp.ne.s32.totalorder %s54, %s57
      %p66 = scmp.eq.s32.totalorder %s28, 2
      %p67 = por %p65, %p66
      %p68 = scmp.ne.s32.totalorder %s57, %s58
      %p69 = scmp.eq.s32.totalorder %s28, 0
      %p70 = por %p68, %p69
      %p71 = scmp.ne.s32.totalorder %s57, %s58
      %p72 = scmp.eq.s32.totalorder %s29, 2
      %p73 = por %p71, %p72
      %p75 = scmp.ne.s32.totalorder %s58, %s74
      %p76 = scmp.eq.s32.totalorder %s29, 0
      %p77 = por %p75, %p76
      %s78 = ssub.s32 %s23, %s30
      %p79 = scmp.eq.s32.totalorder %s78, 0
      %s81 = sadd.s32 %s80, 1
      %s82 = scalar_select %p79, %s80, %s81
      %p85 = pneg %p79
      %p86 = scmp.eq.s32.totalorder %s23, 2
      %p87 = por %p85, %p86
      %p88 = scmp.ne.s32.totalorder %s80, %s83
      %p89 = scmp.eq.s32.totalorder %s23, 0
      %p90 = por %p88, %p89
      %p91 = scmp.ne.s32.totalorder %s80, %s83
      %p92 = scmp.eq.s32.totalorder %s28, 2
      %p93 = por %p91, %p92
      %p94 = scmp.ne.s32.totalorder %s83, %s84
      %p95 = scmp.eq.s32.totalorder %s28, 0
      %p96 = por %p94, %p95
      %p97 = scmp.ne.s32.totalorder %s83, %s84
      %p98 = scmp.eq.s32.totalorder %s29, 2
      %p99 = por %p97, %p98
      %p101 = scmp.ne.s32.totalorder %s84, %s100
      %p102 = scmp.eq.s32.totalorder %s29, 0
      %p103 = por %p101, %p102
      %s105 = sadd.s32 %s104, 1
      %p108 = scmp.eq.s32.totalorder %s23, 2
      %p109 = scmp.ne.s32.totalorder %s104, %s106
      %p110 = scmp.eq.s32.totalorder %s23, 0
      %p111 = por %p109, %p110
      %p112 = scmp.ne.s32.totalorder %s104, %s106
      %p113 = scmp.eq.s32.totalorder %s28, 2
      %p114 = por %p112, %p113
      %p115 = scmp.ne.s32.totalorder %s106, %s107
      %p116 = scmp.eq.s32.totalorder %s28, 0
      %p117 = por %p115, %p116
      %p118 = scmp.ne.s32.totalorder %s106, %s107
      %p119 = scmp.eq.s32.totalorder %s29, 2
      %p120 = por %p118, %p119
      %p122 = scmp.ne.s32.totalorder %s107, %s121
      %p123 = scmp.eq.s32.totalorder %s29, 0
      %p124 = por %p122, %p123
      %s125 = ssub.s32 %s23, %s30
      %p126 = scmp.eq.s32.totalorder %s125, 0
      %s128 = sadd.s32 %s127, 1
      %s129 = scalar_select %p126, %s127, %s128
      %p132 = pneg %p126
      %p133 = scmp.eq.s32.totalorder %s23, 2
      %p134 = por %p132, %p133
      %p135 = scmp.ne.s32.totalorder %s127, %s130
      %p136 = scmp.eq.s32.totalorder %s23, 0
      %p137 = por %p135, %p136
      %p138 = scmp.ne.s32.totalorder %s127, %s130
      %p139 = scmp.eq.s32.totalorder %s28, 2
      %p140 = por %p138, %p139
      %p141 = scmp.ne.s32.totalorder %s130, %s131
      %p142 = scmp.eq.s32.totalorder %s28, 0
      %p143 = por %p141, %p142
      %p144 = scmp.ne.s32.totalorder %s130, %s131
      %p145 = scmp.eq.s32.totalorder %s29, 2
      %p146 = por %p144, %p145
      %p148 = scmp.ne.s32.totalorder %s131, %s147
      %p149 = scmp.eq.s32.totalorder %s29, 0
      %p150 = por %p148, %p149
      %s151 = ssub.s32 %s23, %s30
      %p152 = scmp.eq.s32.totalorder %s151, 0
      %s154 = sadd.s32 %s153, 1
      %s155 = scalar_select %p152, %s153, %s154
      %p158 = pneg %p152
      %p159 = scmp.eq.s32.totalorder %s23, 2
      %p160 = por %p158, %p159
      %p161 = scmp.ne.s32.totalorder %s153, %s156
      %p162 = scmp.eq.s32.totalorder %s23, 0
      %p163 = por %p161, %p162
      %p164 = scmp.ne.s32.totalorder %s153, %s156
      %p165 = scmp.eq.s32.totalorder %s28, 2
      %p166 = por %p164, %p165
      %p167 = scmp.ne.s32.totalorder %s156, %s157
      %p168 = scmp.eq.s32.totalorder %s28, 0
      %p169 = por %p167, %p168
      %p170 = scmp.ne.s32.totalorder %s156, %s157
      %p171 = scmp.eq.s32.totalorder %s29, 2
      %p172 = por %p170, %p171
      %p174 = scmp.ne.s32.totalorder %s157, %s173
      %p175 = scmp.eq.s32.totalorder %s29, 0
      %p176 = por %p174, %p175
      %s177 = ssub.s32 %s23, %s30
      %p178 = scmp.eq.s32.totalorder %s177, 0
      %s180 = sadd.s32 %s179, 1
      %s181 = scalar_select %p178, %s179, %s180
      %p184 = pneg %p178
      %p185 = scmp.eq.s32.totalorder %s23, 2
      %p186 = por %p184, %p185
      %p187 = scmp.ne.s32.totalorder %s179, %s182
      %p188 = scmp.eq.s32.totalorder %s23, 0
      %p189 = por %p187, %p188
      %p190 = scmp.ne.s32.totalorder %s179, %s182
      %p191 = scmp.eq.s32.totalorder %s28, 2
      %p192 = por %p190, %p191
      %p193 = scmp.ne.s32.totalorder %s182, %s183
      %p194 = scmp.eq.s32.totalorder %s28, 0
      %p195 = por %p193, %p194
      %p196 = scmp.ne.s32.totalorder %s182, %s183
      %p197 = scmp.eq.s32.totalorder %s29, 2
      %p198 = por %p196, %p197
      %p200 = scmp.ne.s32.totalorder %s183, %s199
      %p201 = scmp.eq.s32.totalorder %s29, 0
      %p202 = por %p200, %p201
      %p203 = scmp.le.s32.totalorder 1, %s23
      %p204 = scmp.lt.s32.totalorder %s23, 4
      %p205 = pnand %p203, %p204
      %p206 = pneg %p205
      // Predicated region
      $region9: #{tpu_custom_call.1} parent=5 // pred_check
        _
      $region10: #{tpu_custom_call.1} parent=5 // pred_check_branch
        %208 = sbr.rel (%p205) target = $region12
      $region11: #{tpu_custom_call.1} parent=5 // pred_region
        %s209 = ssub.s32 %s23, 1
        // Predicated region
        $region13: #{tpu_custom_call.1} parent=11 // pred_check
          %p210 = pneg %p44
        $region14: #{tpu_custom_call.1} parent=11 // pred_check_branch
          %212 = sbr.rel (%p210) target = $region16
        $region15: #{tpu_custom_call.1} parent=11 // pred_region
          _
        $region16: #{tpu_custom_call.1} parent=11 // pred_fallthru
          _
        // Predicated region
        $region17: #{tpu_custom_call.1} parent=11 // pred_check
          %p213 = pneg %p117
        $region18: #{tpu_custom_call.1} parent=11 // pred_check_branch
          %215 = sbr.rel (%p213) target = $region20
        $region19: #{tpu_custom_call.1} parent=11 // pred_region
          _
        $region20: #{tpu_custom_call.1} parent=11 // pred_fallthru
          _
      $region12: #{tpu_custom_call.1} parent=5 // pred_fallthru
        _
      %p216 = scmp.lt.s32.totalorder %s23, 3
      // Predicated region
      $region21: #{tpu_custom_call.1} parent=5 // pred_check
        %p217 = pneg %p216
      $region22: #{tpu_custom_call.1} parent=5 // pred_check_branch
        %219 = sbr.rel (%p217) target = $region24
      $region23: #{tpu_custom_call.1} parent=5 // pred_region
        // Predicated region
        $region25: #{tpu_custom_call.1} parent=23 // pred_check
          %p220 = pneg %p64
        $region26: #{tpu_custom_call.1} parent=23 // pred_check_branch
          %222 = sbr.rel (%p220) target = $region28
        $region27: #{tpu_custom_call.1} parent=23 // pred_region
          %s223 = sand.u32 %s54, 1
          %s224 = scalar_lea.sflag [#allocation4], %s223
          %s225 = sand.u32 %s54, 1
          %s226 = smul.addr %s225, 256
          %s227 = scalar_lea.vmem [#allocation3], %s226
          %s228 = smul.u32 16, %s23
          %s230 = ssub.s32 4096, 4096
          %231 = vsyncadd %s224, %s230
          %s232 = smul.addr %s228, 2
          %s233 = smul.addr %s232, 128
          %s234 = scalar_lea.hbm %s1, %s233
          %s235 = sshll.u32 %s227, 4
          %s236 = int_to_ptr.vmem [resolvable:$true] %s235
          %241 = dma.hbm_to_vmem [thread:$0]  %s234, 4096, %s236, %s224, 256, 256, 16
        $region28: #{tpu_custom_call.1} parent=23 // pred_fallthru
          _
        // Predicated region
        $region29: #{tpu_custom_call.1} parent=23 // pred_check
          %p242 = pneg %p90
        $region30: #{tpu_custom_call.1} parent=23 // pred_check_branch
          %244 = sbr.rel (%p242) target = $region32
        $region31: #{tpu_custom_call.1} parent=23 // pred_region
          %p245 = scmp.lt.s32.totalorder %s23, 2
          %s246 = scalar_select %p245, %s23, 2
          %s247 = scalar_lea.vmem %s2, %s246
        $region32: #{tpu_custom_call.1} parent=23 // pred_fallthru
          _
      $region24: #{tpu_custom_call.1} parent=5 // pred_fallthru
        _
      %p248 = scmp.le.s32.totalorder 1, %s23
      %p249 = scmp.lt.s32.totalorder %s23, 4
      %p250 = pnand %p248, %p249
      %p251 = pneg %p250
      // Predicated region
      $region33: #{tpu_custom_call.1} parent=5 // pred_check
        _
      $region34: #{tpu_custom_call.1} parent=5 // pred_check_branch
        %253 = sbr.rel (%p250) target = $region36
      $region35: #{tpu_custom_call.1} parent=5 // pred_region
        %s254 = ssub.s32 %s23, 1
        %s255 = sand.u32 %s57, 1
        %s256 = scalar_lea.sflag [#allocation4], %s255
        %s257 = sand.u32 %s57, 1
        %s258 = smul.addr %s257, 256
        %s259 = scalar_lea.vmem [#allocation3], %s258
        // Predicated region
        $region37: #{tpu_custom_call.1} parent=35 // pred_check
          %p260 = pneg %p70
        $region38: #{tpu_custom_call.1} parent=35 // pred_check_branch
          %262 = sbr.rel (%p260) target = $region40
        $region39: #{tpu_custom_call.1} parent=35 // pred_region
          %263 = dma.done %s256, 4096
        $region40: #{tpu_custom_call.1} parent=35 // pred_fallthru
          _
        %p264 = pneg %p44
        %p265 = pneg %p41
        %s266 = sand.u32 %s57, 1
        %s267 = scalar_lea.sflag [#allocation4], %s266
        %s268 = sand.u32 %s57, 1
        %s269 = smul.addr %s268, 256
        %s270 = scalar_lea.vmem [#allocation3], %s269
        %p271 = pneg %p70
        %p272 = pneg %p67
        %p273 = scmp.lt.s32.totalorder %s28, 2
        %s274 = scalar_select %p273, %s28, 2
        %s275 = scalar_lea.vmem %s2, %s274
        %p276 = pneg %p96
        %p277 = pneg %p93
        %p278 = pneg %p117
        %p279 = pneg %p114
        %p280 = pneg %p143
        %p281 = pneg %p140
        %s282 = sand.u32 %s130, 1
        %s283 = scalar_lea.sflag [#allocation5], %s282
        %s284 = sand.u32 %s130, 1
        %s285 = smul.addr %s284, 8
        %s286 = scalar_lea.vmem [#allocation6], %s285
        %p287 = pneg %p169
        %p288 = pneg %p166
        %s289 = sand.u32 %s28, 1
        %s290 = scalar_lea.sflag [#allocation8], %s289
        %s291 = sand.u32 %s156, 1
        %s292 = smul.addr %s291, 256
        %s293 = scalar_lea.vmem [#allocation7], %s292
        %p294 = pneg %p195
        %p295 = pneg %p192
        %s296 = sand.u32 %s28, 1
        %s297 = scalar_lea.sflag [#allocation8], %s296
        %s298 = sand.u32 %s182, 1
        %s299 = smul.addr %s298, 8
        %s300 = scalar_lea.vmem [#allocation9], %s299
        %s301 = smul.u32 16, %s28
        %p302 = scmp.lt.s32.totalorder %s28, 2
        %s303 = scalar_select %p302, %s28, 2
        %s304 = scalar_lea.vmem %s2, %s303
        %s305 = smul.u32 16, %s28
        %s306 = sld [smem:[#allocation2]]
        %v307 = vstv %s306
        %v308 = vrcp.pop %v307
        %s309 = vtos %v308
        %s310 = smul.f32 %s306, -2.0
        %s311 = smul.f32 %s306, -1.8
        %s312 = smul.f32 %s306, 0.8
        %v313 = vld [vmem:[%s259] sm:$0xff]
        %v314 = vld [vmem:[%s259 + $0x8] sm:$0xff]
        %v315 = vld [vmem:[%s259 + $0x10] sm:$0xff]
        %v316 = vld [vmem:[%s259 + $0x18] sm:$0xff]
        %v317 = vld [vmem:[%s259 + $0x20] sm:$0xff]
        %v318 = vld [vmem:[%s259 + $0x28] sm:$0xff]
        %v319 = vld [vmem:[%s259 + $0x30] sm:$0xff]
        %v320 = vld [vmem:[%s259 + $0x38] sm:$0xff]
        %v321 = vld [vmem:[%s259 + $0x40] sm:$0xff]
        %v322 = vld [vmem:[%s259 + $0x48] sm:$0xff]
        %v323 = vld [vmem:[%s259 + $0x50] sm:$0xff]
        %v324 = vld [vmem:[%s259 + $0x58] sm:$0xff]
        %v325 = vld [vmem:[%s259 + $0x60] sm:$0xff]
        %v326 = vld [vmem:[%s259 + $0x68] sm:$0xff]
        %v327 = vld [vmem:[%s259 + $0x70] sm:$0xff]
        %v328 = vld [vmem:[%s259 + $0x78] sm:$0xff]
        %v329 = vld [vmem:[%s259 + $0x80] sm:$0xff]
        %v330 = vld [vmem:[%s259 + $0x88] sm:$0xff]
        %v331 = vld [vmem:[%s259 + $0x90] sm:$0xff]
        %v332 = vld [vmem:[%s259 + $0x98] sm:$0xff]
        %v333 = vld [vmem:[%s259 + $0xa0] sm:$0xff]
        %v334 = vld [vmem:[%s259 + $0xa8] sm:$0xff]
        %v335 = vld [vmem:[%s259 + $0xb0] sm:$0xff]
        %v336 = vld [vmem:[%s259 + $0xb8] sm:$0xff]
        %v337 = vld [vmem:[%s259 + $0xc0] sm:$0xff]
        %v338 = vld [vmem:[%s259 + $0xc8] sm:$0xff]
        %v339 = vld [vmem:[%s259 + $0xd0] sm:$0xff]
        %v340 = vld [vmem:[%s259 + $0xd8] sm:$0xff]
        %v341 = vld [vmem:[%s259 + $0xe0] sm:$0xff]
        %v342 = vld [vmem:[%s259 + $0xe8] sm:$0xff]
        %v343 = vld [vmem:[%s259 + $0xf0] sm:$0xff]
        %v344 = vld [vmem:[%s259 + $0xf8] sm:$0xff]
        %v345 = vstv %s310
        %vm346 = vcmp.le.f32.partialorder %v313, %v345
        %vm347 = vcmp.le.f32.partialorder %v314, %v345
        %vm348 = vcmp.le.f32.partialorder %v315, %v345
        %vm349 = vcmp.le.f32.partialorder %v316, %v345
        %vm350 = vcmp.le.f32.partialorder %v317, %v345
        %vm351 = vcmp.le.f32.partialorder %v318, %v345
        %vm352 = vcmp.le.f32.partialorder %v319, %v345
        %vm353 = vcmp.le.f32.partialorder %v320, %v345
        %vm354 = vcmp.le.f32.partialorder %v321, %v345
        %vm355 = vcmp.le.f32.partialorder %v322, %v345
        %vm356 = vcmp.le.f32.partialorder %v323, %v345
        %vm357 = vcmp.le.f32.partialorder %v324, %v345
        %vm358 = vcmp.le.f32.partialorder %v325, %v345
        %vm359 = vcmp.le.f32.partialorder %v326, %v345
        %vm360 = vcmp.le.f32.partialorder %v327, %v345
        %vm361 = vcmp.le.f32.partialorder %v328, %v345
        %vm362 = vcmp.le.f32.partialorder %v329, %v345
        %vm363 = vcmp.le.f32.partialorder %v330, %v345
        %vm364 = vcmp.le.f32.partialorder %v331, %v345
        %vm365 = vcmp.le.f32.partialorder %v332, %v345
        %vm366 = vcmp.le.f32.partialorder %v333, %v345
        %vm367 = vcmp.le.f32.partialorder %v334, %v345
        %vm368 = vcmp.le.f32.partialorder %v335, %v345
        %vm369 = vcmp.le.f32.partialorder %v336, %v345
        %vm370 = vcmp.le.f32.partialorder %v337, %v345
        %vm371 = vcmp.le.f32.partialorder %v338, %v345
        %vm372 = vcmp.le.f32.partialorder %v339, %v345
        %vm373 = vcmp.le.f32.partialorder %v340, %v345
        %vm374 = vcmp.le.f32.partialorder %v341, %v345
        %vm375 = vcmp.le.f32.partialorder %v342, %v345
        %vm376 = vcmp.le.f32.partialorder %v343, %v345
        %vm377 = vcmp.le.f32.partialorder %v344, %v345
        %v378 = vstv %s311
        %v379 = vsel %vm346, %v378, %v313
        %v380 = vsel %vm347, %v378, %v314
        %v381 = vsel %vm348, %v378, %v315
        %v382 = vsel %vm349, %v378, %v316
        %v383 = vsel %vm350, %v378, %v317
        %v384 = vsel %vm351, %v378, %v318
        %v385 = vsel %vm352, %v378, %v319
        %v386 = vsel %vm353, %v378, %v320
        %v387 = vsel %vm354, %v378, %v321
        %v388 = vsel %vm355, %v378, %v322
        %v389 = vsel %vm356, %v378, %v323
        %v390 = vsel %vm357, %v378, %v324
        %v391 = vsel %vm358, %v378, %v325
        %v392 = vsel %vm359, %v378, %v326
        %v393 = vsel %vm360, %v378, %v327
        %v394 = vsel %vm361, %v378, %v328
        %v395 = vsel %vm362, %v378, %v329
        %v396 = vsel %vm363, %v378, %v330
        %v397 = vsel %vm364, %v378, %v331
        %v398 = vsel %vm365, %v378, %v332
        %v399 = vsel %vm366, %v378, %v333
        %v400 = vsel %vm367, %v378, %v334
        %v401 = vsel %vm368, %v378, %v335
        %v402 = vsel %vm369, %v378, %v336
        %v403 = vsel %vm370, %v378, %v337
        %v404 = vsel %vm371, %v378, %v338
        %v405 = vsel %vm372, %v378, %v339
        %v406 = vsel %vm373, %v378, %v340
        %v407 = vsel %vm374, %v378, %v341
        %v408 = vsel %vm375, %v378, %v342
        %v409 = vsel %vm376, %v378, %v343
        %v410 = vsel %vm377, %v378, %v344
        %v411 = vstv %s306
        %vm412 = vcmp.ge.f32.partialorder %v379, %v411
        %vm413 = vcmp.ge.f32.partialorder %v380, %v411
        %vm414 = vcmp.ge.f32.partialorder %v381, %v411
        %vm415 = vcmp.ge.f32.partialorder %v382, %v411
        %vm416 = vcmp.ge.f32.partialorder %v383, %v411
        %vm417 = vcmp.ge.f32.partialorder %v384, %v411
        %vm418 = vcmp.ge.f32.partialorder %v385, %v411
        %vm419 = vcmp.ge.f32.partialorder %v386, %v411
        %vm420 = vcmp.ge.f32.partialorder %v387, %v411
        %vm421 = vcmp.ge.f32.partialorder %v388, %v411
        %vm422 = vcmp.ge.f32.partialorder %v389, %v411
        %vm423 = vcmp.ge.f32.partialorder %v390, %v411
        %vm424 = vcmp.ge.f32.partialorder %v391, %v411
        %vm425 = vcmp.ge.f32.partialorder %v392, %v411
        %vm426 = vcmp.ge.f32.partialorder %v393, %v411
        %vm427 = vcmp.ge.f32.partialorder %v394, %v411
        %vm428 = vcmp.ge.f32.partialorder %v395, %v411
        %vm429 = vcmp.ge.f32.partialorder %v396, %v411
        %vm430 = vcmp.ge.f32.partialorder %v397, %v411
        %vm431 = vcmp.ge.f32.partialorder %v398, %v411
        %vm432 = vcmp.ge.f32.partialorder %v399, %v411
        %vm433 = vcmp.ge.f32.partialorder %v400, %v411
        %vm434 = vcmp.ge.f32.partialorder %v401, %v411
        %vm435 = vcmp.ge.f32.partialorder %v402, %v411
        %vm436 = vcmp.ge.f32.partialorder %v403, %v411
        %vm437 = vcmp.ge.f32.partialorder %v404, %v411
        %vm438 = vcmp.ge.f32.partialorder %v405, %v411
        %vm439 = vcmp.ge.f32.partialorder %v406, %v411
        %vm440 = vcmp.ge.f32.partialorder %v407, %v411
        %vm441 = vcmp.ge.f32.partialorder %v408, %v411
        %vm442 = vcmp.ge.f32.partialorder %v409, %v411
        %vm443 = vcmp.ge.f32.partialorder %v410, %v411
        %v444 = vstv %s312
        %v445 = vsel %vm412, %v444, %v379
        %v446 = vsel %vm413, %v444, %v380
        %v447 = vsel %vm414, %v444, %v381
        %v448 = vsel %vm415, %v444, %v382
        %v449 = vsel %vm416, %v444, %v383
        %v450 = vsel %vm417, %v444, %v384
        %v451 = vsel %vm418, %v444, %v385
        %v452 = vsel %vm419, %v444, %v386
        %v453 = vsel %vm420, %v444, %v387
        %v454 = vsel %vm421, %v444, %v388
        %v455 = vsel %vm422, %v444, %v389
        %v456 = vsel %vm423, %v444, %v390
        %v457 = vsel %vm424, %v444, %v391
        %v458 = vsel %vm425, %v444, %v392
        %v459 = vsel %vm426, %v444, %v393
        %v460 = vsel %vm427, %v444, %v394
        %v461 = vsel %vm428, %v444, %v395
        %v462 = vsel %vm429, %v444, %v396
        %v463 = vsel %vm430, %v444, %v397
        %v464 = vsel %vm431, %v444, %v398
        %v465 = vsel %vm432, %v444, %v399
        %v466 = vsel %vm433, %v444, %v400
        %v467 = vsel %vm434, %v444, %v401
        %v468 = vsel %vm435, %v444, %v402
        %v469 = vsel %vm436, %v444, %v403
        %v470 = vsel %vm437, %v444, %v404
        %v471 = vsel %vm438, %v444, %v405
        %v472 = vsel %vm439, %v444, %v406
        %v473 = vsel %vm440, %v444, %v407
        %v474 = vsel %vm441, %v444, %v408
        %v475 = vsel %vm442, %v444, %v409
        %v476 = vsel %vm443, %v444, %v410
        %477 = vst [vmem:[%s293] sm:$0xff] %v445
        %478 = vst [vmem:[%s293 + $0x8] sm:$0xff] %v446
        %479 = vst [vmem:[%s293 + $0x10] sm:$0xff] %v447
        %480 = vst [vmem:[%s293 + $0x18] sm:$0xff] %v448
        %481 = vst [vmem:[%s293 + $0x20] sm:$0xff] %v449
        %482 = vst [vmem:[%s293 + $0x28] sm:$0xff] %v450
        %483 = vst [vmem:[%s293 + $0x30] sm:$0xff] %v451
        %484 = vst [vmem:[%s293 + $0x38] sm:$0xff] %v452
        %485 = vst [vmem:[%s293 + $0x40] sm:$0xff] %v453
        %486 = vst [vmem:[%s293 + $0x48] sm:$0xff] %v454
        %487 = vst [vmem:[%s293 + $0x50] sm:$0xff] %v455
        %488 = vst [vmem:[%s293 + $0x58] sm:$0xff] %v456
        %489 = vst [vmem:[%s293 + $0x60] sm:$0xff] %v457
        %490 = vst [vmem:[%s293 + $0x68] sm:$0xff] %v458
        %491 = vst [vmem:[%s293 + $0x70] sm:$0xff] %v459
        %492 = vst [vmem:[%s293 + $0x78] sm:$0xff] %v460
        %493 = vst [vmem:[%s293 + $0x80] sm:$0xff] %v461
        %494 = vst [vmem:[%s293 + $0x88] sm:$0xff] %v462
        %495 = vst [vmem:[%s293 + $0x90] sm:$0xff] %v463
        %496 = vst [vmem:[%s293 + $0x98] sm:$0xff] %v464
        %497 = vst [vmem:[%s293 + $0xa0] sm:$0xff] %v465
        %498 = vst [vmem:[%s293 + $0xa8] sm:$0xff] %v466
        %499 = vst [vmem:[%s293 + $0xb0] sm:$0xff] %v467
        %500 = vst [vmem:[%s293 + $0xb8] sm:$0xff] %v468
        %501 = vst [vmem:[%s293 + $0xc0] sm:$0xff] %v469
        %502 = vst [vmem:[%s293 + $0xc8] sm:$0xff] %v470
        %503 = vst [vmem:[%s293 + $0xd0] sm:$0xff] %v471
        %504 = vst [vmem:[%s293 + $0xd8] sm:$0xff] %v472
        %505 = vst [vmem:[%s293 + $0xe0] sm:$0xff] %v473
        %506 = vst [vmem:[%s293 + $0xe8] sm:$0xff] %v474
        %507 = vst [vmem:[%s293 + $0xf0] sm:$0xff] %v475
        %508 = vst [vmem:[%s293 + $0xf8] sm:$0xff] %v476
        %v509 = vstv %s309
        %v510 = vmul.f32 %v445, %v509
        %v511 = vmul.f32 %v446, %v509
        %v512 = vmul.f32 %v447, %v509
        %v513 = vmul.f32 %v448, %v509
        %v514 = vmul.f32 %v449, %v509
        %v515 = vmul.f32 %v450, %v509
        %v516 = vmul.f32 %v451, %v509
        %v517 = vmul.f32 %v452, %v509
        %v518 = vmul.f32 %v453, %v509
        %v519 = vmul.f32 %v454, %v509
        %v520 = vmul.f32 %v455, %v509
        %v521 = vmul.f32 %v456, %v509
        %v522 = vmul.f32 %v457, %v509
        %v523 = vmul.f32 %v458, %v509
        %v524 = vmul.f32 %v459, %v509
        %v525 = vmul.f32 %v460, %v509
        %v526 = vmul.f32 %v461, %v509
        %v527 = vmul.f32 %v462, %v509
        %v528 = vmul.f32 %v463, %v509
        %v529 = vmul.f32 %v464, %v509
        %v530 = vmul.f32 %v465, %v509
        %v531 = vmul.f32 %v466, %v509
        %v532 = vmul.f32 %v467, %v509
        %v533 = vmul.f32 %v468, %v509
        %v534 = vmul.f32 %v469, %v509
        %v535 = vmul.f32 %v470, %v509
        %v536 = vmul.f32 %v471, %v509
        %v537 = vmul.f32 %v472, %v509
        %v538 = vmul.f32 %v473, %v509
        %v539 = vmul.f32 %v474, %v509
        %v540 = vmul.f32 %v475, %v509
        %v541 = vmul.f32 %v476, %v509
        %v542 = vround.ne.pseudo %v510
        %v543 = vround.ne.pseudo %v511
        %v544 = vround.ne.pseudo %v512
        %v545 = vround.ne.pseudo %v513
        %v546 = vround.ne.pseudo %v514
        %v547 = vround.ne.pseudo %v515
        %v548 = vround.ne.pseudo %v516
        %v549 = vround.ne.pseudo %v517
        %v550 = vround.ne.pseudo %v518
        %v551 = vround.ne.pseudo %v519
        %v552 = vround.ne.pseudo %v520
        %v553 = vround.ne.pseudo %v521
        %v554 = vround.ne.pseudo %v522
        %v555 = vround.ne.pseudo %v523
        %v556 = vround.ne.pseudo %v524
        %v557 = vround.ne.pseudo %v525
        %v558 = vround.ne.pseudo %v526
        %v559 = vround.ne.pseudo %v527
        %v560 = vround.ne.pseudo %v528
        %v561 = vround.ne.pseudo %v529
        %v562 = vround.ne.pseudo %v530
        %v563 = vround.ne.pseudo %v531
        %v564 = vround.ne.pseudo %v532
        %v565 = vround.ne.pseudo %v533
        %v566 = vround.ne.pseudo %v534
        %v567 = vround.ne.pseudo %v535
        %v568 = vround.ne.pseudo %v536
        %v569 = vround.ne.pseudo %v537
        %v570 = vround.ne.pseudo %v538
        %v571 = vround.ne.pseudo %v539
        %v572 = vround.ne.pseudo %v540
        %v573 = vround.ne.pseudo %v541
        %v574 = vmul.f32 %v542, %v411
        %v575 = vmul.f32 %v543, %v411
        %v576 = vmul.f32 %v544, %v411
        %v577 = vmul.f32 %v545, %v411
        %v578 = vmul.f32 %v546, %v411
        %v579 = vmul.f32 %v547, %v411
        %v580 = vmul.f32 %v548, %v411
        %v581 = vmul.f32 %v549, %v411
        %v582 = vmul.f32 %v550, %v411
        %v583 = vmul.f32 %v551, %v411
        %v584 = vmul.f32 %v552, %v411
        %v585 = vmul.f32 %v553, %v411
        %v586 = vmul.f32 %v554, %v411
        %v587 = vmul.f32 %v555, %v411
        %v588 = vmul.f32 %v556, %v411
        %v589 = vmul.f32 %v557, %v411
        %v590 = vmul.f32 %v558, %v411
        %v591 = vmul.f32 %v559, %v411
        %v592 = vmul.f32 %v560, %v411
        %v593 = vmul.f32 %v561, %v411
        %v594 = vmul.f32 %v562, %v411
        %v595 = vmul.f32 %v563, %v411
        %v596 = vmul.f32 %v564, %v411
        %v597 = vmul.f32 %v565, %v411
        %v598 = vmul.f32 %v566, %v411
        %v599 = vmul.f32 %v567, %v411
        %v600 = vmul.f32 %v568, %v411
        %v601 = vmul.f32 %v569, %v411
        %v602 = vmul.f32 %v570, %v411
        %v603 = vmul.f32 %v571, %v411
        %v604 = vmul.f32 %v572, %v411
        %v605 = vmul.f32 %v573, %v411
        %v606 = vsub.f32 %v445, %v574
        %v607 = vsub.f32 %v446, %v575
        %v608 = vsub.f32 %v447, %v576
        %v609 = vsub.f32 %v448, %v577
        %v610 = vsub.f32 %v449, %v578
        %v611 = vsub.f32 %v450, %v579
        %v612 = vsub.f32 %v451, %v580
        %v613 = vsub.f32 %v452, %v581
        %v614 = vsub.f32 %v453, %v582
        %v615 = vsub.f32 %v454, %v583
        %v616 = vsub.f32 %v455, %v584
        %v617 = vsub.f32 %v456, %v585
        %v618 = vsub.f32 %v457, %v586
        %v619 = vsub.f32 %v458, %v587
        %v620 = vsub.f32 %v459, %v588
        %v621 = vsub.f32 %v460, %v589
        %v622 = vsub.f32 %v461, %v590
        %v623 = vsub.f32 %v462, %v591
        %v624 = vsub.f32 %v463, %v592
        %v625 = vsub.f32 %v464, %v593
        %v626 = vsub.f32 %v465, %v594
        %v627 = vsub.f32 %v466, %v595
        %v628 = vsub.f32 %v467, %v596
        %v629 = vsub.f32 %v468, %v597
        %v630 = vsub.f32 %v469, %v598
        %v631 = vsub.f32 %v470, %v599
        %v632 = vsub.f32 %v471, %v600
        %v633 = vsub.f32 %v472, %v601
        %v634 = vsub.f32 %v473, %v602
        %v635 = vsub.f32 %v474, %v603
        %v636 = vsub.f32 %v475, %v604
        %v637 = vsub.f32 %v476, %v605
        %v638 = vmul.f32 %v606, %v606
        %v639 = vmul.f32 %v607, %v607
        %v640 = vmul.f32 %v608, %v608
        %v641 = vmul.f32 %v609, %v609
        %v642 = vmul.f32 %v610, %v610
        %v643 = vmul.f32 %v611, %v611
        %v644 = vmul.f32 %v612, %v612
        %v645 = vmul.f32 %v613, %v613
        %v646 = vmul.f32 %v614, %v614
        %v647 = vmul.f32 %v615, %v615
        %v648 = vmul.f32 %v616, %v616
        %v649 = vmul.f32 %v617, %v617
        %v650 = vmul.f32 %v618, %v618
        %v651 = vmul.f32 %v619, %v619
        %v652 = vmul.f32 %v620, %v620
        %v653 = vmul.f32 %v621, %v621
        %v654 = vmul.f32 %v622, %v622
        %v655 = vmul.f32 %v623, %v623
        %v656 = vmul.f32 %v624, %v624
        %v657 = vmul.f32 %v625, %v625
        %v658 = vmul.f32 %v626, %v626
        %v659 = vmul.f32 %v627, %v627
        %v660 = vmul.f32 %v628, %v628
        %v661 = vmul.f32 %v629, %v629
        %v662 = vmul.f32 %v630, %v630
        %v663 = vmul.f32 %v631, %v631
        %v664 = vmul.f32 %v632, %v632
        %v665 = vmul.f32 %v633, %v633
        %v666 = vmul.f32 %v634, %v634
        %v667 = vmul.f32 %v635, %v635
        %v668 = vmul.f32 %v636, %v636
        %v669 = vmul.f32 %v637, %v637
        %v670 = vadd.f32 %v638, %v639
        %v671 = vadd.f32 %v670, %v640
        %v672 = vadd.f32 %v671, %v641
        %v673 = vadd.f32 %v672, %v642
        %v674 = vadd.f32 %v673, %v643
        %v675 = vadd.f32 %v674, %v644
        %v676 = vadd.f32 %v675, %v645
        %v677 = vadd.f32 %v676, %v646
        %v678 = vadd.f32 %v677, %v647
        %v679 = vadd.f32 %v678, %v648
        %v680 = vadd.f32 %v679, %v649
        %v681 = vadd.f32 %v680, %v650
        %v682 = vadd.f32 %v681, %v651
        %v683 = vadd.f32 %v682, %v652
        %v684 = vadd.f32 %v683, %v653
        %v685 = vadd.f32 %v684, %v654
        %v686 = vadd.f32 %v685, %v655
        %v687 = vadd.f32 %v686, %v656
        %v688 = vadd.f32 %v687, %v657
        %v689 = vadd.f32 %v688, %v658
        %v690 = vadd.f32 %v689, %v659
        %v691 = vadd.f32 %v690, %v660
        %v692 = vadd.f32 %v691, %v661
        %v693 = vadd.f32 %v692, %v662
        %v694 = vadd.f32 %v693, %v663
        %v695 = vadd.f32 %v694, %v664
        %v696 = vadd.f32 %v695, %v665
        %v697 = vadd.f32 %v696, %v666
        %v698 = vadd.f32 %v697, %v667
        %v699 = vadd.f32 %v698, %v668
        %v700 = vadd.f32 %v699, %v669
        %701 = vadd.xlane.f32.xlu0 %v700
        %v702 = vpop.xlane.xlu0 %701
        %v703 = vrot.slane %v702, 4
        %v704 = vadd.f32 %v702, %v703
        %v705 = vrot.slane %v704, 2
        %v706 = vadd.f32 %v704, %v705
        %v707 = vrot.slane %v706, 1
        %v708 = vadd.f32 %v706, %v707
        %s709 = vtos %v708
        %v710 = vlaneseq
        %v711 = vshrl.u32 %v710, 7
        %v712 = vlaneseq
        %v713 = vand.u32 %v712, 127
        %vm714 = vcmp.eq.s32.totalorder %v711, 0
        %vm715 = vcmp.eq.s32.totalorder %v713, 0
        %vm716 = vmand %vm714, %vm715
        %v717 = vstv %s709
        %v718 = vsel %vm716, %v717, 0.0
        %719 = vst [vmem:[%s300] sm:$0xff] %v718
        %v720 = vld [vmem:[%s0] sm:$0xff]
        %v721 = vld [vmem:[%s0 + $0x8] sm:$0xff]
        %v722 = vld [vmem:[%s304] sm:$0x1]
        %v724 = vlaneseq
        %v725 = vshrl.u32 %v724, 7
        %v726 = vsub.s32 0, %v725
        %v727 = vrot.slane %v722, %v726
        %729 = vmatprep.subr.mxu0 %v575
        %730 = vmatpush1.xpose.msra.mxu0 %v574
        %731 = vmatprep.subr.mxu0 %v577
        %732 = vmatpush1.xpose.msra.mxu0 %v576
        %733 = vmatprep.subr.mxu0 %v579
        %734 = vmatpush1.xpose.msra.mxu0 %v578
        %735 = vmatprep.subr.mxu0 %v581
        %736 = vmatpush1.xpose.msra.mxu0 %v580
        %737 = vmatprep.subr.mxu0 %v583
        %738 = vmatpush1.xpose.msra.mxu0 %v582
        %739 = vmatprep.subr.mxu0 %v585
        %740 = vmatpush1.xpose.msra.mxu0 %v584
        %741 = vmatprep.subr.mxu0 %v587
        %742 = vmatpush1.xpose.msra.mxu0 %v586
        %743 = vmatprep.subr.mxu0 %v589
        %744 = vmatpush1.xpose.msra.mxu0 %v588
        %745 = vmatprep.subr.mxu0 %v591
        %746 = vmatpush1.xpose.msra.mxu0 %v590
        %747 = vmatprep.subr.mxu0 %v593
        %748 = vmatpush1.xpose.msra.mxu0 %v592
        %749 = vmatprep.subr.mxu0 %v595
        %750 = vmatpush1.xpose.msra.mxu0 %v594
        %751 = vmatprep.subr.mxu0 %v597
        %752 = vmatpush1.xpose.msra.mxu0 %v596
        %753 = vmatprep.subr.mxu0 %v599
        %754 = vmatpush1.xpose.msra.mxu0 %v598
        %755 = vmatprep.subr.mxu0 %v601
        %756 = vmatpush1.xpose.msra.mxu0 %v600
        %757 = vmatprep.subr.mxu0 %v603
        %758 = vmatpush1.xpose.msra.mxu0 %v602
        %759 = vmatprep.subr.mxu0 %v605
        %760 = vmatpush1.xpose.msra.mxu0 %v604
        %761 = vmatprep.subr.mxu0 0.0
        %762 = vmatpush1.xpose.msra.mxu0 0.0
        %763 = vmatprep.subr.mxu0 0.0
        %764 = vmatpush1.xpose.msra.mxu0 0.0
        %765 = vmatprep.subr.mxu0 0.0
        %766 = vmatpush1.xpose.msra.mxu0 0.0
        %767 = vmatprep.subr.mxu0 0.0
        %768 = vmatpush1.xpose.msra.mxu0 0.0
        %769 = vmatprep.subr.mxu0 0.0
        %770 = vmatpush1.xpose.msra.mxu0 0.0
        %771 = vmatprep.subr.mxu0 0.0
        %772 = vmatpush1.xpose.msra.mxu0 0.0
        %773 = vmatprep.subr.mxu0 0.0
        %774 = vmatpush1.xpose.msra.mxu0 0.0
        %775 = vmatprep.subr.mxu0 0.0
        %776 = vmatpush1.xpose.msra.mxu0 0.0
        %777 = vmatprep.subr.mxu0 0.0
        %778 = vmatpush1.xpose.msra.mxu0 0.0
        %779 = vmatprep.subr.mxu0 0.0
        %780 = vmatpush1.xpose.msra.mxu0 0.0
        %781 = vmatprep.subr.mxu0 0.0
        %782 = vmatpush1.xpose.msra.mxu0 0.0
        %783 = vmatprep.subr.mxu0 0.0
        %784 = vmatpush1.xpose.msra.mxu0 0.0
        %785 = vmatprep.subr.mxu0 0.0
        %786 = vmatpush1.xpose.msra.mxu0 0.0
        %787 = vmatprep.subr.mxu0 0.0
        %788 = vmatpush1.xpose.msra.mxu0 0.0
        %789 = vmatprep.subr.mxu0 0.0
        %790 = vmatpush1.xpose.msra.mxu0 0.0
        %791 = vmatprep.subr.mxu0 0.0
        %792 = vmatpush1.xpose.msra.mxu0 0.0
        %793 = vmatprep.mubr.f32.mxu0 %v721
        %794 = vmatmul.mubr.f32.gmra.mrb[0].mxu0 %v720
        %v795 = vpop.f32.mrb[0].mxu0
        %v796 = vadd.f32 %v727, %v795
        %v797 = vpop.f32.mrb[0].mxu0
        %798 = vdwg.mxu0
        %799 = vst [vmem:[%s286] sm:$0xff] %v796
        %s800 = sand.u32 %s130, 1
        %s801 = scalar_lea.sflag [#allocation5], %s800
        %s802 = sand.u32 %s130, 1
        %s803 = smul.addr %s802, 8
        %s804 = scalar_lea.vmem [#allocation6], %s803
        %s805 = sand.u32 %s28, 1
        %s806 = scalar_lea.sflag [#allocation8], %s805
        %s807 = sand.u32 %s156, 1
        %s808 = smul.addr %s807, 256
        %s809 = scalar_lea.vmem [#allocation7], %s808
        %s810 = sand.u32 %s28, 1
        %s811 = scalar_lea.sflag [#allocation8], %s810
        %s812 = sand.u32 %s182, 1
        %s813 = smul.addr %s812, 8
        %s814 = scalar_lea.vmem [#allocation9], %s813
        // Predicated region
        $region41: #{tpu_custom_call.1} parent=35 // pred_check
          %p815 = pneg %p140
        $region42: #{tpu_custom_call.1} parent=35 // pred_check_branch
          %817 = sbr.rel (%p815) target = $region44
        $region43: #{tpu_custom_call.1} parent=35 // pred_region
          %s819 = ssub.s32 128, 128
          %820 = vsyncadd %s801, %s819
          %s821 = smul.addr %s28, 128
          %s822 = scalar_lea.hbm %s4, %s821
          %s824 = sshll.u32 %s804, 4
          %s825 = int_to_ptr.vmem [resolvable:$true] %s824
          %827 = dma.vmem_to_hbm [thread:$0]  %s825, 128, %s822, %s801
        $region44: #{tpu_custom_call.1} parent=35 // pred_fallthru
          _
        // Predicated region
        $region45: #{tpu_custom_call.1} parent=35 // pred_check
          %p828 = pneg %p166
        $region46: #{tpu_custom_call.1} parent=35 // pred_check_branch
          %830 = sbr.rel (%p828) target = $region48
        $region47: #{tpu_custom_call.1} parent=35 // pred_region
          %s831 = smul.u32 16, %s28
          %s833 = ssub.s32 4096, 4096
          %834 = vsyncadd %s806, %s833
          %s835 = smul.addr %s831, 2
          %s836 = smul.addr %s835, 128
          %s837 = scalar_lea.hbm %s5, %s836
          %s838 = sshll.u32 %s809, 4
          %s839 = int_to_ptr.vmem [resolvable:$true] %s838
          %844 = dma.vmem_to_hbm [thread:$0]  %s839, 4096, %s837, %s806, 256, 256, 16
        $region48: #{tpu_custom_call.1} parent=35 // pred_fallthru
          _
        // Predicated region
        $region49: #{tpu_custom_call.1} parent=35 // pred_check
          %p845 = pneg %p192
        $region50: #{tpu_custom_call.1} parent=35 // pred_check_branch
          %847 = sbr.rel (%p845) target = $region52
        $region51: #{tpu_custom_call.1} parent=35 // pred_region
          %s849 = ssub.s32 128, 128
          %850 = vsyncadd %s811, %s849
          %s851 = smul.addr %s28, 128
          %s852 = scalar_lea.hbm %s6, %s851
          %s854 = sshll.u32 %s814, 4
          %s855 = int_to_ptr.vmem [resolvable:$true] %s854
          %857 = dma.vmem_to_hbm [thread:$0]  %s855, 128, %s852, %s811
        $region52: #{tpu_custom_call.1} parent=35 // pred_fallthru
          _
      $region36: #{tpu_custom_call.1} parent=5 // pred_fallthru
        _
      %p858 = scmp.le.s32.totalorder 2, %s23
      // Predicated region
      $region53: #{tpu_custom_call.1} parent=5 // pred_check
        %p859 = pneg %p858
      $region54: #{tpu_custom_call.1} parent=5 // pred_check_branch
        %861 = sbr.rel (%p859) target = $region56
      $region55: #{tpu_custom_call.1} parent=5 // pred_region
        %s862 = ssub.s32 %s23, 2
        // Predicated region
        $region57: #{tpu_custom_call.1} parent=55 // pred_check
          %p863 = pneg %p146
        $region58: #{tpu_custom_call.1} parent=55 // pred_check_branch
          %865 = sbr.rel (%p863) target = $region60
        $region59: #{tpu_custom_call.1} parent=55 // pred_region
          %s866 = sand.u32 %s131, 1
          %s867 = scalar_lea.sflag [#allocation5], %s866
          %s868 = sand.u32 %s131, 1
          %s869 = smul.addr %s868, 8
          %s870 = scalar_lea.vmem [#allocation6], %s869
          %871 = dma.done %s867, 128
        $region60: #{tpu_custom_call.1} parent=55 // pred_fallthru
          _
        // Predicated region
        $region61: #{tpu_custom_call.1} parent=55 // pred_check
          %p872 = pneg %p172
        $region62: #{tpu_custom_call.1} parent=55 // pred_check_branch
          %874 = sbr.rel (%p872) target = $region64
        $region63: #{tpu_custom_call.1} parent=55 // pred_region
          %s875 = sand.u32 %s29, 1
          %s876 = scalar_lea.sflag [#allocation8], %s875
          %s877 = sand.u32 %s157, 1
          %s878 = smul.addr %s877, 256
          %s879 = scalar_lea.vmem [#allocation7], %s878
          %880 = dma.done %s876, 4096
        $region64: #{tpu_custom_call.1} parent=55 // pred_fallthru
          _
        // Predicated region
        $region65: #{tpu_custom_call.1} parent=55 // pred_check
          %p881 = pneg %p198
        $region66: #{tpu_custom_call.1} parent=55 // pred_check_branch
          %883 = sbr.rel (%p881) target = $region68
        $region67: #{tpu_custom_call.1} parent=55 // pred_region
          %s884 = sand.u32 %s29, 1
          %s885 = scalar_lea.sflag [#allocation8], %s884
          %s886 = sand.u32 %s183, 1
          %s887 = smul.addr %s886, 8
          %s888 = scalar_lea.vmem [#allocation9], %s887
          %889 = dma.done %s885, 128
        $region68: #{tpu_custom_call.1} parent=55 // pred_fallthru
          _
      $region56: #{tpu_custom_call.1} parent=5 // pred_fallthru
        _
    $region6: #{tpu_custom_call.1} parent=1 // loop_footer
      %s27 = sadd.s32 1, %s23
    $region7: #{tpu_custom_call.1} parent=1 // loop_footer_branch
      %22 = sbr.rel target = $region3
    $region8: #{tpu_custom_call.1} parent=1 // loop_exit
      _
    %890 = vsyncpa [#allocation4], 1
    %s891 = scalar_lea.sflag [#allocation4], 1
    %892 = vsyncpa %s891, 1
    %893 = vsyncpa [#allocation5], 1
    %s894 = scalar_lea.sflag [#allocation5], 1
    %895 = vsyncpa %s894, 1
    %896 = vsyncpa [#allocation8], 1
    %s897 = scalar_lea.sflag [#allocation8], 1
    %898 = vsyncpa %s897, 1

</llo_original>
